<compile_context>
chip_gen: v7x
topology: tpu7x:2x2x1
jax: 0.10.0
libtpu: 0.0.40
codegen_flags: <defaults>
</compile_context>

<pallas_src>
import jax
import jax.numpy as jnp
from jax.experimental import pallas as pl
from jax.experimental.pallas import tpu as pltpu


# ---------------- fused activation / output lane layout ----------------------
_LANES = 128
_IN = 16            # input feature size (= c_sizes[0] = r_sizes[0])
_CLS_LO = 8         # class logits/probs live in lanes [_CLS_LO, _CLS_LO + n_class)
_REG_LANE = 0       # regression output lives in lane 0

# ---------------- packed parameter slab layout (rows 8-aligned, 128 lanes) ---
_W1_R = 0           # rows   0..15  (16,128)  layer-1 weights, both heads
_B1_R = 16          # row   16      (1,128)   layer-1 bias
_W2_R = 24          # rows  24..151 (128,128) layer-2 weights (block diagonal)
_B2_R = 152         # row  152      (1,128)   layer-2 bias
_W3_R = 160         # rows 160..287 (128,128) layer-3 weights (class + reg)
_B3_R = 288         # row  288      (1,128)   layer-3 bias
_NEG_R = 296        # row  296      (1,128)   additive softmax mask
_SLAB_ROWS = 304    # ~152 KiB f32 -- VMEM-trivial on all generations


def _round_up(n, m):
    return ((n + m - 1) // m) * m


# ------------------------------- kernel --------------------------------------
def fused_multitask_kernel(x_ref, p_ref, cls_ref, reg_ref):
    x = x_ref[...]                                   # (TB, 16) f32

    # Full-lane, tile-aligned views of the resident parameter slab (free).
    w1 = p_ref[_W1_R:_W1_R + _IN, :]                 # (16, 128)
    b1 = p_ref[_B1_R:_B1_R + 1, :]                   # (1, 128)
    w2 = p_ref[_W2_R:_W2_R + _LANES, :]              # (128, 128)
    b2 = p_ref[_B2_R:_B2_R + 1, :]                   # (1, 128)
    w3 = p_ref[_W3_R:_W3_R + _LANES, :]              # (128, 128)
    b3 = p_ref[_B3_R:_B3_R + 1, :]                   # (1, 128)
    neg = p_ref[_NEG_R:_NEG_R + 1, :]                # (1, 128)

    # Fused classifier+regressor MLP: 3 MXU matmuls.  The zero lane/row padding
    # is free on the MXU (one 128-wide tile pass per 8 input rows per matmul)
    # and keeps every intermediate lane-dense.
    h = jnp.maximum(jnp.dot(x, w1, preferred_element_type=jnp.float32) + b1, 0.0)
    # TODO(synk): training-mode Dropout(p=0.5) would mask lanes 0:16 of `h` here.
    h = jnp.maximum(jnp.dot(h, w2, preferred_element_type=jnp.float32) + b2, 0.0)
    y = jnp.dot(h, w3, preferred_element_type=jnp.float32) + b3     # (TB, 128)

    # Regression value sits in lane 0 -> ship lanes 0:8 as a small f32 output
    # (offset-0 lane slice: no relayout, regression keeps full f32 precision).
    reg_ref[...] = y[:, 0:8]

    # Numerically-stable softmax over the class lanes only.  `neg` is 0 on the
    # class lanes and -1e30 elsewhere, so a single broadcast add removes the
    # regression / padding lanes from both the max and the sum (their exp
    # underflows to exactly 0).  Exact divide so rows sum to 1 at f32 accuracy.
    z = y + neg
    m = jnp.max(z, axis=-1, keepdims=True)
    e = jnp.exp(z - m)
    probs = e / jnp.sum(e, axis=-1, keepdims=True)
    cls_ref[...] = probs.astype(cls_ref.dtype)       # bf16; non-class lanes == 0


# --------------------------- parameter packing --------------------------------
def pack_params(p):
    """Fuse + zero-pad the 12 per-head tensors into one (304, 128) f32 slab.

    Lane layout of the fused activations / outputs:
      layer-1 hidden : lanes 0:8 = classifier, lanes 8:16 = regressor
      layer-2 hidden : lanes 0:4 = classifier, lanes 4:8  = regressor
      layer-3 output : lane 0 = regression, lanes 8:8+n_class = class logits
    """
    c_in, c_h1 = p["cw1"].shape
    c_h2 = p["cw2"].shape[1]
    r_in, r_h1 = p["rw1"].shape
    r_h2 = p["rw2"].shape[1]
    n_class = p["cw3"].shape[1]
    assert c_in == _IN and r_in == _IN
    assert c_h1 + r_h1 <= _LANES and c_h2 + r_h2 <= _LANES
    assert _CLS_LO + n_class <= _LANES and c_h2 + r_h2 <= _CLS_LO

    slab = jnp.zeros((_SLAB_ROWS, _LANES), jnp.float32)
    # layer 1: both heads side by side along the lane axis
    slab = slab.at[_W1_R:_W1_R + c_in, 0:c_h1].set(p["cw1"])
    slab = slab.at[_W1_R:_W1_R + c_in, c_h1:c_h1 + r_h1].set(p["rw1"])
    slab = slab.at[_B1_R, 0:c_h1].set(p["cb1"][0])
    slab = slab.at[_B1_R, c_h1:c_h1 + r_h1].set(p["rb1"][0])
    # layer 2: block-diagonal
    slab = slab.at[_W2_R:_W2_R + c_h1, 0:c_h2].set(p["cw2"])
    slab = slab.at[_W2_R + c_h1:_W2_R + c_h1 + r_h1, c_h2:c_h2 + r_h2].set(p["rw2"])
    slab = slab.at[_B2_R, 0:c_h2].set(p["cb2"][0])
    slab = slab.at[_B2_R, c_h2:c_h2 + r_h2].set(p["rb2"][0])
    # layer 3: classifier -> lanes [_CLS_LO, _CLS_LO + n_class), regressor -> lane 0
    slab = slab.at[_W3_R:_W3_R + c_h2, _CLS_LO:_CLS_LO + n_class].set(p["cw3"])
    slab = slab.at[_W3_R + c_h2:_W3_R + c_h2 + r_h2, _REG_LANE].set(p["rw3"][:, 0])
    slab = slab.at[_B3_R, _CLS_LO:_CLS_LO + n_class].set(p["cb3"][0])
    slab = slab.at[_B3_R, _REG_LANE].set(p["rb3"][0, 0])
    # additive softmax mask: 0 on class lanes, -1e30 everywhere else
    lane = jnp.arange(_LANES)
    neg = jnp.where((lane >= _CLS_LO) & (lane < _CLS_LO + n_class), 0.0, -1e30)
    slab = slab.at[_NEG_R, :].set(neg.astype(jnp.float32))
    return slab, n_class


# ------------------------------ forward wrapper -------------------------------
def multitask_forward_packed(x, slab, n_class, *, batch_block=8192):
    """x: (B, 16) f32.  Returns (class_probs (B, n_class) bf16, reg (B, 1) f32)."""
    B, F = x.shape
    assert F == _IN, f"expected {_IN} input features, got {F}"

    # Batch tiling: big tiles amortise the ~0.35us/step overhead, and we force
    # >=2 grid steps when B allows so v7x can shard them over its 2 TensorCores.
    B8 = _round_up(B, 8)
    n_steps = pl.cdiv(B8, batch_block)
    if B8 >= 16:
        n_steps = max(n_steps, 2)
    TB = _round_up(pl.cdiv(B8, n_steps), 8)
    grid = (pl.cdiv(B, TB),)          # ragged last block; no host-side pad of x

    # Explicit VMEM budget (v5e's scoped default is only 16 MiB): two buffers
    # per streamed block (x / bf16 cls out / f32 reg out, all lane-padded to
    # 128 in VMEM) plus the resident weight slab, plus slack.
    vmem_bytes = 2 * TB * _LANES * (4 + 2 + 4) + 2 * _SLAB_ROWS * _LANES * 4
    vmem_limit = int(min(max(vmem_bytes + (2 << 20), 16 << 20), 64 << 20))

    cls_pad, reg8 = pl.pallas_call(
        fused_multitask_kernel,
        grid=grid,
        in_specs=[
            pl.BlockSpec((TB, _IN), lambda i: (i, 0)),
            pl.BlockSpec((_SLAB_ROWS, _LANES), lambda i: (0, 0)),   # resident weights
        ],
        out_specs=[
            pl.BlockSpec((TB, _LANES), lambda i: (i, 0)),
            pl.BlockSpec((TB, 8), lambda i: (i, 0)),
        ],
        out_shape=[
            jax.ShapeDtypeStruct((B, _LANES), jnp.bfloat16),   # class probabilities
            jax.ShapeDtypeStruct((B, 8), jnp.float32),         # regression (lane 0)
        ],
        compiler_params=pltpu.CompilerParams(
            dimension_semantics=("parallel",),
            vmem_limit_bytes=vmem_limit),
        cost_estimate=pl.CostEstimate(
            # effective (lane-padded) MXU work; exp runs on all 128 lanes
            flops=2 * B * _LANES * (_IN + _LANES + _LANES),
            transcendentals=B * _LANES,
            bytes_accessed=(B * _IN * 4 + _SLAB_ROWS * _LANES * 4
                            + B * _LANES * 2 + B * 8 * 4)),
    )(x, slab)

    return cls_pad[:, _CLS_LO:_CLS_LO + n_class], reg8[:, _REG_LANE:_REG_LANE + 1]


def make_multitask_forward(params, *, batch_block=8192):
    """Pack the 12 weight/bias tensors once and return a jitted forward(x)."""
    slab, n_class = pack_params(params)     # runs once, outside the hot path

    @jax.jit
    def forward(x):
        return multitask_forward_packed(x, slab, n_class, batch_block=batch_block)

    return forward


# ------------------------------ init & reference ------------------------------
def init_params(key, c_sizes=(16, 8, 4), r_sizes=(16, 8, 4), class_op_size=22):
    """Deterministic init mimicking PyTorch nn.Linear default (U[-1/sqrt(fan_in), +])."""
    params = {}

    def linear(key, fan_in, fan_out):
        kw, kb = jax.random.split(key)
        bound = 1.0 / jnp.sqrt(float(fan_in))
        # stored as (in, out): y = x @ W + b
        w = jax.random.uniform(kw, (fan_in, fan_out), jnp.float32, -bound, bound)
        b = jax.random.uniform(kb, (1, fan_out), jnp.float32, -bound, bound)
        return w, b

    keys = jax.random.split(key, 6)
    params["cw1"], params["cb1"] = linear(keys[0], c_sizes[0], c_sizes[1])
    params["cw2"], params["cb2"] = linear(keys[1], c_sizes[1], c_sizes[2])
    params["cw3"], params["cb3"] = linear(keys[2], c_sizes[2], class_op_size)
    params["rw1"], params["rb1"] = linear(keys[3], r_sizes[0], r_sizes[1])
    params["rw2"], params["rb2"] = linear(keys[4], r_sizes[1], r_sizes[2])
    params["rw3"], params["rb3"] = linear(keys[5], r_sizes[2], 1)
    return params


def reference_forward(x, p):
    """Pure-JAX reference (two separate heads) for sanity checking."""
    def head(x, w1, b1, w2, b2, w3, b3):
        h = jnp.maximum(x @ w1 + b1, 0.0)
        h = jnp.maximum(h @ w2 + b2, 0.0)
        return h @ w3 + b3

    logits = head(x, p["cw1"], p["cb1"], p["cw2"], p["cb2"], p["cw3"], p["cb3"])
    cls = jax.nn.softmax(logits, axis=1)
    reg = head(x, p["rw1"], p["rb1"], p["rw2"], p["rb2"], p["rw3"], p["rb3"])
    return cls, reg


# ------------------------------------ main ------------------------------------
if __name__ == "__main__":
    key = jax.random.PRNGKey(0)
    k_x, k_p = jax.random.split(key)

    B = 8  # small batch; input feature size = c_sizes[0] = r_sizes[0] = 16
    x = jax.random.normal(k_x, (B, _IN), dtype=jnp.float32)
    params = init_params(k_p)

    forward = make_multitask_forward(params)
    cls_out, reg_out = forward(x)
    jax.block_until_ready((cls_out, reg_out))

    cls_ref, reg_ref = reference_forward(x, params)
    assert cls_out.shape == (B, 22) and reg_out.shape == (B, 1)
    assert cls_out.dtype == jnp.bfloat16 and reg_out.dtype == jnp.float32

    cls_f32 = cls_out.astype(jnp.float32)
    # class probabilities are emitted in bf16 (halves the HBM writeback)
    assert jnp.allclose(cls_f32, cls_ref, atol=1e-2, rtol=1e-2)
    # exact-division softmax: rows sum to 1 up to bf16 output rounding
    assert jnp.allclose(jnp.sum(cls_f32, axis=1), 1.0, atol=1e-2)
    # regression path stays float32 end to end
    assert jnp.allclose(reg_out, reg_ref, atol=2e-3, rtol=2e-3)

    print("KERNEL_OK")
</pallas_src>

<mosaic_0001>
module attributes {stable_mosaic.version = 11 : i64} {
  func.func @fused_multitask_kernel(%arg0: i32, %arg1: memref<8x16xf32, #tpu.memory_space<vmem>>, %arg2: memref<304x128xf32, #tpu.memory_space<vmem>>, %arg3: memref<8x128xbf16, #tpu.memory_space<vmem>>, %arg4: memref<8x8xf32, #tpu.memory_space<vmem>>) attributes {dimension_semantics = [#tpu.dimension_semantics<parallel>], iteration_bounds = array<i64: 1>, scalar_prefetch = 0 : i64, scratch_operands = 0 : i64, tpu.core_type = #tpu.core_type<tc>, window_params = [{transform_indices = @transform_0, window_bounds = array<i64: 8, 16>}, {pipeline_mode = #tpu.pipeline_mode<synchronous>, transform_indices = @transform_1, window_bounds = array<i64: 304, 128>}, {transform_indices = @transform_2, window_bounds = array<i64: 8, 128>}, {transform_indices = @transform_3, window_bounds = array<i64: 8, 8>}]} {
    %c0 = arith.constant 0 : index
    %c0_0 = arith.constant 0 : index
    %0 = vector.load %arg1[%c0, %c0_0] : memref<8x16xf32, #tpu.memory_space<vmem>>, vector<8x16xf32>
    %c0_1 = arith.constant 0 : index
    %c0_2 = arith.constant 0 : index
    %1 = vector.load %arg2[%c0_1, %c0_2] : memref<304x128xf32, #tpu.memory_space<vmem>>, vector<16x128xf32>
    %c16 = arith.constant 16 : index
    %c0_3 = arith.constant 0 : index
    %2 = vector.load %arg2[%c16, %c0_3] : memref<304x128xf32, #tpu.memory_space<vmem>>, vector<1x128xf32>
    %c24 = arith.constant 24 : index
    %c0_4 = arith.constant 0 : index
    %3 = vector.load %arg2[%c24, %c0_4] : memref<304x128xf32, #tpu.memory_space<vmem>>, vector<128x128xf32>
    %c152 = arith.constant 152 : index
    %c0_5 = arith.constant 0 : index
    %4 = vector.load %arg2[%c152, %c0_5] : memref<304x128xf32, #tpu.memory_space<vmem>>, vector<1x128xf32>
    %c160 = arith.constant 160 : index
    %c0_6 = arith.constant 0 : index
    %5 = vector.load %arg2[%c160, %c0_6] : memref<304x128xf32, #tpu.memory_space<vmem>>, vector<128x128xf32>
    %c288 = arith.constant 288 : index
    %c0_7 = arith.constant 0 : index
    %6 = vector.load %arg2[%c288, %c0_7] : memref<304x128xf32, #tpu.memory_space<vmem>>, vector<1x128xf32>
    %c296 = arith.constant 296 : index
    %c0_8 = arith.constant 0 : index
    %7 = vector.load %arg2[%c296, %c0_8] : memref<304x128xf32, #tpu.memory_space<vmem>>, vector<1x128xf32>
    %cst = arith.constant dense<0.000000e+00> : vector<8x128xf32>
    %8 = tpu.matmul %0, %1, %cst {dimension_numbers = #tpu.dot_dimension_numbers<[1], [0], [0], [1], [0, 0, 1, 1], [], []>} : vector<8x16xf32>, vector<16x128xf32>, vector<8x128xf32> -> vector<8x128xf32>
    %9 = vector.broadcast %2 : vector<1x128xf32> to vector<8x128xf32>
    %10 = arith.addf %8, %9 : vector<8x128xf32>
    %cst_9 = arith.constant 0.000000e+00 : f32
    %11 = vector.broadcast %cst_9 : f32 to vector<8x128xf32>
    %12 = arith.maximumf %10, %11 : vector<8x128xf32>
    %cst_10 = arith.constant dense<0.000000e+00> : vector<8x128xf32>
    %13 = tpu.matmul %12, %3, %cst_10 {dimension_numbers = #tpu.dot_dimension_numbers<[1], [0], [0], [1], [0, 0, 1, 1], [], []>} : vector<8x128xf32>, vector<128x128xf32>, vector<8x128xf32> -> vector<8x128xf32>
    %14 = vector.broadcast %4 : vector<1x128xf32> to vector<8x128xf32>
    %15 = arith.addf %13, %14 : vector<8x128xf32>
    %cst_11 = arith.constant 0.000000e+00 : f32
    %16 = vector.broadcast %cst_11 : f32 to vector<8x128xf32>
    %17 = arith.maximumf %15, %16 : vector<8x128xf32>
    %cst_12 = arith.constant dense<0.000000e+00> : vector<8x128xf32>
    %18 = tpu.matmul %17, %5, %cst_12 {dimension_numbers = #tpu.dot_dimension_numbers<[1], [0], [0], [1], [0, 0, 1, 1], [], []>} : vector<8x128xf32>, vector<128x128xf32>, vector<8x128xf32> -> vector<8x128xf32>
    %19 = vector.broadcast %6 : vector<1x128xf32> to vector<8x128xf32>
    %20 = arith.addf %18, %19 : vector<8x128xf32>
    %21 = vector.extract_strided_slice %20 {offsets = [0, 0], sizes = [8, 8], strides = [1, 1]} : vector<8x128xf32> to vector<8x8xf32>
    %c0_13 = arith.constant 0 : index
    %c0_14 = arith.constant 0 : index
    %22 = vector.load %arg4[%c0_13, %c0_14] : memref<8x8xf32, #tpu.memory_space<vmem>>, vector<8x8xf32>
    tpu.vector_store %arg4[%c0_13, %c0_14], %21 {strides = array<i32>} : memref<8x8xf32, #tpu.memory_space<vmem>>, vector<8x8xf32>,
    %23 = vector.broadcast %7 : vector<1x128xf32> to vector<8x128xf32>
    %24 = arith.addf %20, %23 : vector<8x128xf32>
    %cst_15 = arith.constant dense<0xFF800000> : vector<8xf32>
    %25 = vector.multi_reduction <maximumf>, %24, %cst_15 [1] : vector<8x128xf32> to vector<8xf32>
    %26 = vector.shape_cast %25 : vector<8xf32> to vector<8x1xf32>
    %27 = vector.broadcast %26 : vector<8x1xf32> to vector<8x128xf32>
    %28 = arith.subf %24, %27 : vector<8x128xf32>
    %29 = math.exp %28 : vector<8x128xf32>
    %cst_16 = arith.constant dense<0.000000e+00> : vector<8xf32>
    %30 = vector.multi_reduction <add>, %29, %cst_16 [1] : vector<8x128xf32> to vector<8xf32>
    %31 = vector.shape_cast %30 : vector<8xf32> to vector<8x1xf32>
    %32 = vector.broadcast %31 : vector<8x1xf32> to vector<8x128xf32>
    %33 = arith.divf %29, %32 : vector<8x128xf32>
    %34 = arith.truncf %33 : vector<8x128xf32> to vector<8x128xbf16>
    %c0_17 = arith.constant 0 : index
    %c0_18 = arith.constant 0 : index
    %35 = vector.load %arg3[%c0_17, %c0_18] : memref<8x128xbf16, #tpu.memory_space<vmem>>, vector<8x128xbf16>
    tpu.vector_store %arg3[%c0_17, %c0_18], %34 {strides = array<i32>} : memref<8x128xbf16, #tpu.memory_space<vmem>>, vector<8x128xbf16>,
    return
  }
  func.func @transform_0(%arg0: i32) -> (i32, i32) {
    %c0_i32 = arith.constant 0 : i32
    %c0_i32_0 = arith.constant 0 : i32
    return %arg0, %c0_i32 : i32, i32
  }
  func.func @transform_1(%arg0: i32) -> (i32, i32) {
    %c0_i32 = arith.constant 0 : i32
    %c0_i32_0 = arith.constant 0 : i32
    %c0_i32_1 = arith.constant 0 : i32
    return %c0_i32, %c0_i32_0 : i32, i32
  }
  func.func @transform_2(%arg0: i32) -> (i32, i32) {
    %c0_i32 = arith.constant 0 : i32
    %c0_i32_0 = arith.constant 0 : i32
    return %arg0, %c0_i32 : i32, i32
  }
  func.func @transform_3(%arg0: i32) -> (i32, i32) {
    %c0_i32 = arith.constant 0 : i32
    %c0_i32_0 = arith.constant 0 : i32
    return %arg0, %c0_i32 : i32, i32
  }
}

</mosaic_0001>

<llo_original>
// kernel: forward.1
$region0: #{forward.1}
  #allocation0 [shape = 'u32[]', space=smem, size = 0x4, offset = 0x4, fixed_abs, tag = 'smem constant byte address 0x4 - core index']
  #allocation1 [shape = 'u32[144,128]{1,0:T(1,128)}', space=vmem, size = 0x12000, scoped, tag = 'internal scratch']
  %s0 = inlined_call_operand.hbm [shape: f32[8,16], index: 0, kind: input, shape index: {}]
  %s1 = inlined_call_operand.hbm [shape: f32[304,128], index: 1, kind: input, shape index: {}]
  %s2 = inlined_call_operand.vmem [shape: bf16[8,128], index: 2, kind: output, shape index: {0}]
  %s3 = inlined_call_operand.vmem [shape: f32[8,8], index: 3, kind: output, shape index: {1}]
  %4 = xla_tuple %s2, %s3
  %s5 = sld [smem:[#allocation0]]
  $region34: #{forward.1} parent=0
    _
  %s7 = ssub.s32 1, %s5
  %s8 = scalar_select 0, %s7, %s5
  $region1: #{forward.1} parent=0
    #allocation2 [shape = 'u8[4096]{0}', space=vmem, size = 0x1000, scoped, tag = 'input window, operand 0, single buffered']
    #allocation3 [shape = 's32[1]{0}', space=sflag, size = 0x4, scoped, tag = 'scoped memory for forward.1']
    #allocation4 [shape = 'u8[155648]{0}', space=vmem, size = 0x26000, scoped, tag = 'input window, operand 1, single buffered']
    #allocation5 [shape = 's32[1]{0}', space=sflag, size = 0x4, scoped, tag = 'scoped memory for forward.1']
    %9 = vsyncpa [#allocation3], 0
    %10 = vsyncpa [#allocation5], 0
    // Predicated region
    $region2: #{forward.1} parent=1 // pred_check
      _
    $region3: #{forward.1} parent=1 // pred_check_branch
      %12 = sbr.rel (0) target = $region5
    $region4: #{forward.1} parent=1 // pred_region
      %s14 = ssub.s32 128, 128
      %15 = vsyncadd [#allocation3], %s14
      %s17 = sshll.u32 [#allocation2], 4
      %s18 = int_to_ptr.vmem [resolvable:$true] %s17
      %20 = dma.hbm_to_vmem [thread:$0]  %s0, 128, %s18, [#allocation3]
    $region5: #{forward.1} parent=1 // pred_fallthru
      _
    // Predicated region
    $region6: #{forward.1} parent=1 // pred_check
      _
    $region7: #{forward.1} parent=1 // pred_check_branch
      %22 = sbr.rel (0) target = $region9
    $region8: #{forward.1} parent=1 // pred_region
      %s24 = ssub.s32 4864, 4864
      %25 = vsyncadd [#allocation5], %s24
      %s26 = sshll.u32 [#allocation4], 4
      %s27 = int_to_ptr.vmem [resolvable:$true] %s26
      %32 = dma.hbm_to_vmem [thread:$0]  %s1, 4864, %s27, [#allocation5], 128, 128, 8
    $region9: #{forward.1} parent=1 // pred_fallthru
      _
    // Predicated region
    $region10: #{forward.1} parent=1 // pred_check
      _
    $region11: #{forward.1} parent=1 // pred_check_branch
      %34 = sbr.rel (0) target = $region13
    $region12: #{forward.1} parent=1 // pred_region
      %35 = dma.done [#allocation3], 128
    $region13: #{forward.1} parent=1 // pred_fallthru
      _
    // Predicated region
    $region14: #{forward.1} parent=1 // pred_check
      _
    $region15: #{forward.1} parent=1 // pred_check_branch
      %37 = sbr.rel (0) target = $region17
    $region16: #{forward.1} parent=1 // pred_region
      %38 = dma.done [#allocation5], 4864
    $region17: #{forward.1} parent=1 // pred_fallthru
      _
    %v39 = vld [vmem:[#allocation2] sm:$0xff]
    %v40 = vld [vmem:[#allocation4] sm:$0xff]
    %v41 = vld [vmem:[#allocation4 + $0x8] sm:$0xff]
    %v42 = vld [vmem:[#allocation4 + $0x10] sm:$0x1]
    %v43 = vld [vmem:[#allocation4 + $0x18] sm:$0xff]
    %v44 = vld [vmem:[#allocation4 + $0x20] sm:$0xff]
    %v45 = vld [vmem:[#allocation4 + $0x28] sm:$0xff]
    %v46 = vld [vmem:[#allocation4 + $0x30] sm:$0xff]
    %v47 = vld [vmem:[#allocation4 + $0x38] sm:$0xff]
    %v48 = vld [vmem:[#allocation4 + $0x40] sm:$0xff]
    %v49 = vld [vmem:[#allocation4 + $0x48] sm:$0xff]
    %v50 = vld [vmem:[#allocation4 + $0x50] sm:$0xff]
    %v51 = vld [vmem:[#allocation4 + $0x58] sm:$0xff]
    %v52 = vld [vmem:[#allocation4 + $0x60] sm:$0xff]
    %v53 = vld [vmem:[#allocation4 + $0x68] sm:$0xff]
    %v54 = vld [vmem:[#allocation4 + $0x70] sm:$0xff]
    %v55 = vld [vmem:[#allocation4 + $0x78] sm:$0xff]
    %v56 = vld [vmem:[#allocation4 + $0x80] sm:$0xff]
    %v57 = vld [vmem:[#allocation4 + $0x88] sm:$0xff]
    %v58 = vld [vmem:[#allocation4 + $0x90] sm:$0xff]
    %v59 = vld [vmem:[#allocation4 + $0x98] sm:$0x1]
    %v60 = vld [vmem:[#allocation4 + $0xa0] sm:$0xff]
    %v61 = vld [vmem:[#allocation4 + $0xa8] sm:$0xff]
    %v62 = vld [vmem:[#allocation4 + $0xb0] sm:$0xff]
    %v63 = vld [vmem:[#allocation4 + $0xb8] sm:$0xff]
    %v64 = vld [vmem:[#allocation4 + $0xc0] sm:$0xff]
    %v65 = vld [vmem:[#allocation4 + $0xc8] sm:$0xff]
    %v66 = vld [vmem:[#allocation4 + $0xd0] sm:$0xff]
    %v67 = vld [vmem:[#allocation4 + $0xd8] sm:$0xff]
    %v68 = vld [vmem:[#allocation4 + $0xe0] sm:$0xff]
    %v69 = vld [vmem:[#allocation4 + $0xe8] sm:$0xff]
    %v70 = vld [vmem:[#allocation4 + $0xf0] sm:$0xff]
    %v71 = vld [vmem:[#allocation4 + $0xf8] sm:$0xff]
    %v72 = vld [vmem:[#allocation4 + $0x100] sm:$0xff]
    %v73 = vld [vmem:[#allocation4 + $0x108] sm:$0xff]
    %v74 = vld [vmem:[#allocation4 + $0x110] sm:$0xff]
    %v75 = vld [vmem:[#allocation4 + $0x118] sm:$0xff]
    %v76 = vld [vmem:[#allocation4 + $0x120] sm:$0x1]
    %v77 = vld [vmem:[#allocation4 + $0x128] sm:$0x1]
    %v78 = vlaneseq
    %v79 = vshrl.u32 %v78, 7
    %v80 = vsub.s32 0, %v79
    %v81 = vrot.slane %v42, %v80
    %vm82 = vcmask 130048
    %v84 = vsel %vm82, %v39, 0
    %86 = vmatprep.subr.mxu0 0.0
    %87 = vmatpush1.msra.mxu0 %v40
    %88 = vmatprep.subr.mxu0 0.0
    %89 = vmatpush1.msra.mxu0 %v41
    %90 = vmatprep.subr.mxu0 0.0
    %91 = vmatpush1.msra.mxu0 0.0
    %92 = vmatprep.subr.mxu0 0.0
    %93 = vmatpush1.msra.mxu0 0.0
    %94 = vmatprep.subr.mxu0 0.0
    %95 = vmatpush1.msra.mxu0 0.0
    %96 = vmatprep.subr.mxu0 0.0
    %97 = vmatpush1.msra.mxu0 0.0
    %98 = vmatprep.subr.mxu0 0.0
    %99 = vmatpush1.msra.mxu0 0.0
    %100 = vmatprep.subr.mxu0 0.0
    %101 = vmatpush1.msra.mxu0 0.0
    %102 = vmatprep.subr.mxu0 0.0
    %103 = vmatpush1.msra.mxu0 0.0
    %104 = vmatprep.subr.mxu0 0.0
    %105 = vmatpush1.msra.mxu0 0.0
    %106 = vmatprep.subr.mxu0 0.0
    %107 = vmatpush1.msra.mxu0 0.0
    %108 = vmatprep.subr.mxu0 0.0
    %109 = vmatpush1.msra.mxu0 0.0
    %110 = vmatprep.subr.mxu0 0.0
    %111 = vmatpush1.msra.mxu0 0.0
    %112 = vmatprep.subr.mxu0 0.0
    %113 = vmatpush1.msra.mxu0 0.0
    %114 = vmatprep.subr.mxu0 0.0
    %115 = vmatpush1.msra.mxu0 0.0
    %116 = vmatprep.subr.mxu0 0.0
    %117 = vmatpush1.msra.mxu0 0.0
    %118 = vmatprep.subr.mxu0 0.0
    %119 = vmatpush1.msra.mxu0 0.0
    %120 = vmatprep.subr.mxu0 0.0
    %121 = vmatpush1.msra.mxu0 0.0
    %122 = vmatprep.subr.mxu0 0.0
    %123 = vmatpush1.msra.mxu0 0.0
    %124 = vmatprep.subr.mxu0 0.0
    %125 = vmatpush1.msra.mxu0 0.0
    %126 = vmatprep.subr.mxu0 0.0
    %127 = vmatpush1.msra.mxu0 0.0
    %128 = vmatprep.subr.mxu0 0.0
    %129 = vmatpush1.msra.mxu0 0.0
    %130 = vmatprep.subr.mxu0 0.0
    %131 = vmatpush1.msra.mxu0 0.0
    %132 = vmatprep.subr.mxu0 0.0
    %133 = vmatpush1.msra.mxu0 0.0
    %134 = vmatprep.subr.mxu0 0.0
    %135 = vmatpush1.msra.mxu0 0.0
    %136 = vmatprep.subr.mxu0 0.0
    %137 = vmatpush1.msra.mxu0 0.0
    %138 = vmatprep.subr.mxu0 0.0
    %139 = vmatpush1.msra.mxu0 0.0
    %140 = vmatprep.subr.mxu0 0.0
    %141 = vmatpush1.msra.mxu0 0.0
    %142 = vmatprep.subr.mxu0 0.0
    %143 = vmatpush1.msra.mxu0 0.0
    %144 = vmatprep.subr.mxu0 0.0
    %145 = vmatpush1.msra.mxu0 0.0
    %146 = vmatprep.subr.mxu0 0.0
    %147 = vmatpush1.msra.mxu0 0.0
    %148 = vmatprep.subr.mxu0 0.0
    %149 = vmatpush1.msra.mxu0 0.0
    %150 = vmatprep.mubr.f32.mxu0 0.0
    %151 = vmatmul.mubr.f32.gmra.mrb[0].mxu0 %v84
    %v152 = vpop.f32.mrb[0].mxu0
    %v153 = vadd.f32 %v81, %v152
    %v154 = vpop.f32.mrb[0].mxu0
    %155 = vdwg.mxu0
    %v156 = vmax.f32 %v153, 0.0
    %v157 = vlaneseq
    %v158 = vshrl.u32 %v157, 7
    %v159 = vsub.s32 0, %v158
    %v160 = vrot.slane %v59, %v159
    %161 = vmatprep.subr.mxu0 0.0
    %162 = vmatpush1.msra.mxu0 %v43
    %163 = vmatprep.subr.mxu0 0.0
    %164 = vmatpush1.msra.mxu0 %v44
    %165 = vmatprep.subr.mxu0 0.0
    %166 = vmatpush1.msra.mxu0 %v45
    %167 = vmatprep.subr.mxu0 0.0
    %168 = vmatpush1.msra.mxu0 %v46
    %169 = vmatprep.subr.mxu0 0.0
    %170 = vmatpush1.msra.mxu0 %v47
    %171 = vmatprep.subr.mxu0 0.0
    %172 = vmatpush1.msra.mxu0 %v48
    %173 = vmatprep.subr.mxu0 0.0
    %174 = vmatpush1.msra.mxu0 %v49
    %175 = vmatprep.subr.mxu0 0.0
    %176 = vmatpush1.msra.mxu0 %v50
    %177 = vmatprep.subr.mxu0 0.0
    %178 = vmatpush1.msra.mxu0 %v51
    %179 = vmatprep.subr.mxu0 0.0
    %180 = vmatpush1.msra.mxu0 %v52
    %181 = vmatprep.subr.mxu0 0.0
    %182 = vmatpush1.msra.mxu0 %v53
    %183 = vmatprep.subr.mxu0 0.0
    %184 = vmatpush1.msra.mxu0 %v54
    %185 = vmatprep.subr.mxu0 0.0
    %186 = vmatpush1.msra.mxu0 %v55
    %187 = vmatprep.subr.mxu0 0.0
    %188 = vmatpush1.msra.mxu0 %v56
    %189 = vmatprep.subr.mxu0 0.0
    %190 = vmatpush1.msra.mxu0 %v57
    %191 = vmatprep.subr.mxu0 0.0
    %192 = vmatpush1.msra.mxu0 %v58
    %193 = vmatprep.subr.mxu0 0.0
    %194 = vmatpush1.msra.mxu0 0.0
    %195 = vmatprep.subr.mxu0 0.0
    %196 = vmatpush1.msra.mxu0 0.0
    %197 = vmatprep.subr.mxu0 0.0
    %198 = vmatpush1.msra.mxu0 0.0
    %199 = vmatprep.subr.mxu0 0.0
    %200 = vmatpush1.msra.mxu0 0.0
    %201 = vmatprep.subr.mxu0 0.0
    %202 = vmatpush1.msra.mxu0 0.0
    %203 = vmatprep.subr.mxu0 0.0
    %204 = vmatpush1.msra.mxu0 0.0
    %205 = vmatprep.subr.mxu0 0.0
    %206 = vmatpush1.msra.mxu0 0.0
    %207 = vmatprep.subr.mxu0 0.0
    %208 = vmatpush1.msra.mxu0 0.0
    %209 = vmatprep.subr.mxu0 0.0
    %210 = vmatpush1.msra.mxu0 0.0
    %211 = vmatprep.subr.mxu0 0.0
    %212 = vmatpush1.msra.mxu0 0.0
    %213 = vmatprep.subr.mxu0 0.0
    %214 = vmatpush1.msra.mxu0 0.0
    %215 = vmatprep.subr.mxu0 0.0
    %216 = vmatpush1.msra.mxu0 0.0
    %217 = vmatprep.subr.mxu0 0.0
    %218 = vmatpush1.msra.mxu0 0.0
    %219 = vmatprep.subr.mxu0 0.0
    %220 = vmatpush1.msra.mxu0 0.0
    %221 = vmatprep.subr.mxu0 0.0
    %222 = vmatpush1.msra.mxu0 0.0
    %223 = vmatprep.subr.mxu0 0.0
    %224 = vmatpush1.msra.mxu0 0.0
    %225 = vmatprep.mubr.f32.mxu0 0.0
    %226 = vmatmul.mubr.f32.gmra.mrb[0].mxu0 %v156
    %v227 = vpop.f32.mrb[0].mxu0
    %v228 = vadd.f32 %v160, %v227
    %v229 = vpop.f32.mrb[0].mxu0
    %230 = vdwg.mxu0
    %v231 = vmax.f32 %v228, 0.0
    %v232 = vlaneseq
    %v233 = vshrl.u32 %v232, 7
    %v234 = vsub.s32 0, %v233
    %v235 = vrot.slane %v76, %v234
    %236 = vmatprep.subr.mxu0 0.0
    %237 = vmatpush1.msra.mxu0 %v60
    %238 = vmatprep.subr.mxu0 0.0
    %239 = vmatpush1.msra.mxu0 %v61
    %240 = vmatprep.subr.mxu0 0.0
    %241 = vmatpush1.msra.mxu0 %v62
    %242 = vmatprep.subr.mxu0 0.0
    %243 = vmatpush1.msra.mxu0 %v63
    %244 = vmatprep.subr.mxu0 0.0
    %245 = vmatpush1.msra.mxu0 %v64
    %246 = vmatprep.subr.mxu0 0.0
    %247 = vmatpush1.msra.mxu0 %v65
    %248 = vmatprep.subr.mxu0 0.0
    %249 = vmatpush1.msra.mxu0 %v66
    %250 = vmatprep.subr.mxu0 0.0
    %251 = vmatpush1.msra.mxu0 %v67
    %252 = vmatprep.subr.mxu0 0.0
    %253 = vmatpush1.msra.mxu0 %v68
    %254 = vmatprep.subr.mxu0 0.0
    %255 = vmatpush1.msra.mxu0 %v69
    %256 = vmatprep.subr.mxu0 0.0
    %257 = vmatpush1.msra.mxu0 %v70
    %258 = vmatprep.subr.mxu0 0.0
    %259 = vmatpush1.msra.mxu0 %v71
    %260 = vmatprep.subr.mxu0 0.0
    %261 = vmatpush1.msra.mxu0 %v72
    %262 = vmatprep.subr.mxu0 0.0
    %263 = vmatpush1.msra.mxu0 %v73
    %264 = vmatprep.subr.mxu0 0.0
    %265 = vmatpush1.msra.mxu0 %v74
    %266 = vmatprep.subr.mxu0 0.0
    %267 = vmatpush1.msra.mxu0 %v75
    %268 = vmatprep.subr.mxu0 0.0
    %269 = vmatpush1.msra.mxu0 0.0
    %270 = vmatprep.subr.mxu0 0.0
    %271 = vmatpush1.msra.mxu0 0.0
    %272 = vmatprep.subr.mxu0 0.0
    %273 = vmatpush1.msra.mxu0 0.0
    %274 = vmatprep.subr.mxu0 0.0
    %275 = vmatpush1.msra.mxu0 0.0
    %276 = vmatprep.subr.mxu0 0.0
    %277 = vmatpush1.msra.mxu0 0.0
    %278 = vmatprep.subr.mxu0 0.0
    %279 = vmatpush1.msra.mxu0 0.0
    %280 = vmatprep.subr.mxu0 0.0
    %281 = vmatpush1.msra.mxu0 0.0
    %282 = vmatprep.subr.mxu0 0.0
    %283 = vmatpush1.msra.mxu0 0.0
    %284 = vmatprep.subr.mxu0 0.0
    %285 = vmatpush1.msra.mxu0 0.0
    %286 = vmatprep.subr.mxu0 0.0
    %287 = vmatpush1.msra.mxu0 0.0
    %288 = vmatprep.subr.mxu0 0.0
    %289 = vmatpush1.msra.mxu0 0.0
    %290 = vmatprep.subr.mxu0 0.0
    %291 = vmatpush1.msra.mxu0 0.0
    %292 = vmatprep.subr.mxu0 0.0
    %293 = vmatpush1.msra.mxu0 0.0
    %294 = vmatprep.subr.mxu0 0.0
    %295 = vmatpush1.msra.mxu0 0.0
    %296 = vmatprep.subr.mxu0 0.0
    %297 = vmatpush1.msra.mxu0 0.0
    %298 = vmatprep.subr.mxu0 0.0
    %299 = vmatpush1.msra.mxu0 0.0
    %300 = vmatprep.mubr.f32.mxu0 0.0
    %301 = vmatmul.mubr.f32.gmra.mrb[0].mxu0 %v231
    %v302 = vpop.f32.mrb[0].mxu0
    %v303 = vadd.f32 %v235, %v302
    %v304 = vpop.f32.mrb[0].mxu0
    %305 = vdwg.mxu0
    %vm306 = vcmask 64512
    %307 = vst.msk [vmem:[%s3] sm:$0xff] %vm306, %v303
    %v308 = vlaneseq
    %v309 = vshrl.u32 %v308, 7
    %v310 = vsub.s32 0, %v309
    %v311 = vrot.slane %v77, %v310
    %v312 = vadd.f32 %v303, %v311
    %313 = vmax.xlane.f32.xlu0 %v312
    %v314 = vpop.xlane.xlu0 %313
    %v315 = vsub.f32 %v312, %v314
    %v316 = vmul.f32 %v315, 1.442695
    %v317 = vpow.pop %v316
    %318 = vadd.xlane.f32.xlu0 %v317
    %v319 = vpop.xlane.xlu0 %318
    %v320 = vrcp.pop %v319
    %v321 = vmul.f32 %v317, %v320
    %v322 = vpack.c.bf16 %v321, %v321
    %323 = vst [vmem:[%s2] sm:$0xf] %v322
    // Predicated region
    $region18: #{forward.1} parent=1 // pred_check
      _
    $region19: #{forward.1} parent=1 // pred_check_branch
      %325 = sbr.rel (0) target = $region21
    $region20: #{forward.1} parent=1 // pred_region
      _
    $region21: #{forward.1} parent=1 // pred_fallthru
      _
    // Predicated region
    $region22: #{forward.1} parent=1 // pred_check
      _
    $region23: #{forward.1} parent=1 // pred_check_branch
      %327 = sbr.rel (0) target = $region25
    $region24: #{forward.1} parent=1 // pred_region
      _
    $region25: #{forward.1} parent=1 // pred_fallthru
      _
    // Predicated region
    $region26: #{forward.1} parent=1 // pred_check
      _
    $region27: #{forward.1} parent=1 // pred_check_branch
      %329 = sbr.rel (0) target = $region29
    $region28: #{forward.1} parent=1 // pred_region
      _
    $region29: #{forward.1} parent=1 // pred_fallthru
      _
    // Predicated region
    $region30: #{forward.1} parent=1 // pred_check
      _
    $region31: #{forward.1} parent=1 // pred_check_branch
      %331 = sbr.rel (0) target = $region33
    $region32: #{forward.1} parent=1 // pred_region
      _
    $region33: #{forward.1} parent=1 // pred_fallthru
      _
    %332 = vsyncpa [#allocation3], 1
    %333 = vsyncpa [#allocation5], 1

</llo_original>
